<compile_context>
chip_gen: v7x
topology: tpu7x:2x2x1
jax: 0.10.0
libtpu: 0.0.40
codegen_flags: <defaults>
</compile_context>

<pallas_src>
import math

import jax
import jax.numpy as jnp
from jax.experimental import pallas as pl
from jax.experimental.pallas import tpu as pltpu


# ---------------------------------------------------------------------------
# Kernel: tiled matmul with lane-dense bias, f32 accumulator.
# ---------------------------------------------------------------------------
def _matmul_bias_kernel(a_ref, b_ref, bias_ref, o_ref, acc_ref):
    # a_ref:    [tm, tk]   (VMEM)
    # b_ref:    [tk, tn]   (VMEM)
    # bias_ref: [1,  tn]   (VMEM, lane-dense)
    # o_ref:    [tm, tn]   (VMEM, lane-dense)
    # acc_ref:  [tm, tn]   f32 scratch, persists across the K grid axis
    k = pl.program_id(2)

    @pl.when(k == 0)
    def _():
        acc_ref[...] = jnp.zeros_like(acc_ref)

    acc_ref[...] += jnp.dot(
        a_ref[...], b_ref[...], preferred_element_type=jnp.float32
    )

    @pl.when(k == pl.num_programs(2) - 1)
    def _():
        o_ref[...] = (acc_ref[...] + bias_ref[...].astype(jnp.float32)).astype(
            o_ref.dtype
        )


def _round_up(x, m):
    return ((x + m - 1) // m) * m


def _matmul_bias(a, b, bias, *, max_tile=512):
    """Compute a @ b + bias[None, :] with a tiled Pallas kernel.

    a: (M, K), b: (K, N), bias: (N,) -> (M, N).
    Handles arbitrary M/K/N by zero-padding to tile multiples in the wrapper.
    """
    M, K = a.shape
    K2, N = b.shape
    assert K == K2
    assert bias.shape == (N,)

    # Tile sizes: multiples of 128 (lane-dense stores, (8,128)-aligned),
    # capped at max_tile so the double-buffered VMEM footprint stays small
    # (<= 2 inputs * 2 buffers * 512*512*4B = 4 MiB) on every TPU generation.
    tm = min(max_tile, _round_up(M, 128))
    tn = min(max_tile, _round_up(N, 128))
    tk = min(max_tile, _round_up(K, 128))

    Mp = _round_up(M, tm)
    Np = _round_up(N, tn)
    Kp = _round_up(K, tk)

    a_p = jnp.pad(a, ((0, Mp - M), (0, Kp - K)))
    b_p = jnp.pad(b, ((0, Kp - K), (0, Np - N)))
    bias_p = jnp.pad(bias, (0, Np - N)).reshape(1, Np)  # lane-dense bias row

    grid = (Mp // tm, Np // tn, Kp // tk)  # reduction axis last

    out_p = pl.pallas_call(
        _matmul_bias_kernel,
        out_shape=jax.ShapeDtypeStruct((Mp, Np), a.dtype),
        grid_spec=pltpu.PrefetchScalarGridSpec(
            num_scalar_prefetch=0,
            grid=grid,
            in_specs=[
                pl.BlockSpec((tm, tk), lambda i, j, k: (i, k)),
                pl.BlockSpec((tk, tn), lambda i, j, k: (k, j)),
                pl.BlockSpec((1, tn), lambda i, j, k: (0, j)),
            ],
            out_specs=pl.BlockSpec((tm, tn), lambda i, j, k: (i, j)),
            scratch_shapes=[pltpu.VMEM((tm, tn), jnp.float32)],
        ),
        compiler_params=pltpu.CompilerParams(
            dimension_semantics=("parallel", "parallel", "arbitrary"),
        ),
    )(a_p, b_p, bias_p)

    return out_p[:M, :N]


# ---------------------------------------------------------------------------
# GraphConvolution forward.
# ---------------------------------------------------------------------------
def graph_convolution(layer_input, adj, weight, bias):
    """out = adj @ (layer_input @ weight.T + bias).

    layer_input: (n_nodes, in_features)
    adj:         (n_nodes, n_nodes)   (dense-valued adjacency)
    weight:      (out_features, in_features)   (torch.nn.Linear layout)
    bias:        (out_features,)
    returns:     (n_nodes, out_features)
    """
    # Transpose once in the wrapper (HBM layout), not per-tile in the kernel.
    w_t = weight.T  # (in_features, out_features)
    h = _matmul_bias(layer_input, w_t, bias)  # Linear
    zero_bias = jnp.zeros((h.shape[1],), dtype=h.dtype)
    out = _matmul_bias(adj, h, zero_bias)  # adj @ x
    return out


def init_params(key, in_features, out_features, dtype=jnp.float32):
    """Reproduce torch.nn.Linear default init (deterministically in JAX).

    weight: kaiming_uniform_(a=sqrt(5)) -> U(-1/sqrt(fan_in), 1/sqrt(fan_in))
    bias:   U(-1/sqrt(fan_in), 1/sqrt(fan_in))
    """
    kw, kb = jax.random.split(key)
    bound = 1.0 / math.sqrt(in_features)
    weight = jax.random.uniform(
        kw, (out_features, in_features), minval=-bound, maxval=bound, dtype=dtype
    )
    bias = jax.random.uniform(
        kb, (out_features,), minval=-bound, maxval=bound, dtype=dtype
    )
    return weight, bias


if __name__ == "__main__":
    n_nodes = 16
    in_features = 32
    out_features = 64

    key = jax.random.PRNGKey(0)
    k_in, k_adj_v, k_adj_m, k_par = jax.random.split(key, 4)

    layer_input = jax.random.normal(k_in, (n_nodes, in_features), dtype=jnp.float32)

    # Sparse-ish adjacency stored dense (torch.sparse.mm math is identical).
    adj_vals = jax.random.uniform(k_adj_v, (n_nodes, n_nodes), dtype=jnp.float32)
    adj_mask = (
        jax.random.uniform(k_adj_m, (n_nodes, n_nodes), dtype=jnp.float32) > 0.6
    ).astype(jnp.float32)
    adj = adj_vals * adj_mask

    weight, bias = init_params(k_par, in_features, out_features)

    out = graph_convolution(layer_input, adj, weight, bias)
    out = jax.block_until_ready(out)

    # Plain-JAX reference.
    ref = adj @ (layer_input @ weight.T + bias)
    assert out.shape == (n_nodes, out_features)
    assert jnp.allclose(out, ref, atol=1e-4, rtol=1e-4)

    print("KERNEL_OK")
</pallas_src>

<mosaic_0001>
module attributes {stable_mosaic.version = 11 : i64} {
  func.func @_matmul_bias_kernel(%arg0: i32, %arg1: i32, %arg2: i32, %arg3: memref<128x128xf32, #tpu.memory_space<vmem>>, %arg4: memref<128x128xf32, #tpu.memory_space<vmem>>, %arg5: memref<1x128xf32, #tpu.memory_space<vmem>>, %arg6: memref<128x128xf32, #tpu.memory_space<vmem>>, %arg7: memref<128x128xf32, #tpu.memory_space<vmem>>) attributes {dimension_semantics = [#tpu.dimension_semantics<parallel>, #tpu.dimension_semantics<parallel>, #tpu.dimension_semantics<arbitrary>], iteration_bounds = array<i64: 1, 1, 1>, scalar_prefetch = 0 : i64, scratch_operands = 1 : i64, tpu.core_type = #tpu.core_type<tc>, window_params = [{transform_indices = @transform_0, window_bounds = array<i64: 128, 128>}, {transform_indices = @transform_1, window_bounds = array<i64: 128, 128>}, {transform_indices = @transform_2, window_bounds = array<i64: 1, 128>}, {transform_indices = @transform_3, window_bounds = array<i64: 128, 128>}]} {
    %c0_i32 = arith.constant 0 : i32
    %0 = arith.cmpi eq, %arg2, %c0_i32 : i32
    %1 = arith.extui %0 : i1 to i32
    %c0_i32_0 = arith.constant 0 : i32
    %2 = arith.cmpi ne, %1, %c0_i32_0 : i32
    scf.if %2 {
      %cst_10 = arith.constant 0.000000e+00 : f32
      %12 = vector.broadcast %cst_10 : f32 to vector<128x128xf32>
      %c0_11 = arith.constant 0 : index
      %c0_12 = arith.constant 0 : index
      %13 = vector.load %arg7[%c0_11, %c0_12] : memref<128x128xf32, #tpu.memory_space<vmem>>, vector<128x128xf32>
      tpu.vector_store %arg7[%c0_11, %c0_12], %12 {strides = array<i32>} : memref<128x128xf32, #tpu.memory_space<vmem>>, vector<128x128xf32>,
    } else {
    }
    %c0 = arith.constant 0 : index
    %c0_1 = arith.constant 0 : index
    %3 = vector.load %arg7[%c0, %c0_1] : memref<128x128xf32, #tpu.memory_space<vmem>>, vector<128x128xf32>
    %c0_2 = arith.constant 0 : index
    %c0_3 = arith.constant 0 : index
    %4 = vector.load %arg3[%c0_2, %c0_3] : memref<128x128xf32, #tpu.memory_space<vmem>>, vector<128x128xf32>
    %c0_4 = arith.constant 0 : index
    %c0_5 = arith.constant 0 : index
    %5 = vector.load %arg4[%c0_4, %c0_5] : memref<128x128xf32, #tpu.memory_space<vmem>>, vector<128x128xf32>
    %cst = arith.constant dense<0.000000e+00> : vector<128x128xf32>
    %6 = tpu.matmul %4, %5, %cst {dimension_numbers = #tpu.dot_dimension_numbers<[1], [0], [0], [1], [0, 0, 1, 1], [], []>} : vector<128x128xf32>, vector<128x128xf32>, vector<128x128xf32> -> vector<128x128xf32>
    %7 = arith.addf %3, %6 : vector<128x128xf32>
    %c0_6 = arith.constant 0 : index
    %c0_7 = arith.constant 0 : index
    %8 = vector.load %arg7[%c0_6, %c0_7] : memref<128x128xf32, #tpu.memory_space<vmem>>, vector<128x128xf32>
    tpu.vector_store %arg7[%c0_6, %c0_7], %7 {strides = array<i32>} : memref<128x128xf32, #tpu.memory_space<vmem>>, vector<128x128xf32>,
    %c0_i32_8 = arith.constant 0 : i32
    %9 = arith.cmpi eq, %arg2, %c0_i32_8 : i32
    %10 = arith.extui %9 : i1 to i32
    %c0_i32_9 = arith.constant 0 : i32
    %11 = arith.cmpi ne, %10, %c0_i32_9 : i32
    scf.if %11 {
      %c0_10 = arith.constant 0 : index
      %c0_11 = arith.constant 0 : index
      %12 = vector.load %arg7[%c0_10, %c0_11] : memref<128x128xf32, #tpu.memory_space<vmem>>, vector<128x128xf32>
      %c0_12 = arith.constant 0 : index
      %c0_13 = arith.constant 0 : index
      %13 = vector.load %arg5[%c0_12, %c0_13] : memref<1x128xf32, #tpu.memory_space<vmem>>, vector<1x128xf32>
      %14 = vector.broadcast %13 : vector<1x128xf32> to vector<128x128xf32>
      %15 = arith.addf %12, %14 : vector<128x128xf32>
      %c0_14 = arith.constant 0 : index
      %c0_15 = arith.constant 0 : index
      %16 = vector.load %arg6[%c0_14, %c0_15] : memref<128x128xf32, #tpu.memory_space<vmem>>, vector<128x128xf32>
      tpu.vector_store %arg6[%c0_14, %c0_15], %15 {strides = array<i32>} : memref<128x128xf32, #tpu.memory_space<vmem>>, vector<128x128xf32>,
    } else {
    }
    return
  }
  func.func @transform_0(%arg0: i32, %arg1: i32, %arg2: i32) -> (i32, i32) {
    %c0_i32 = arith.constant 0 : i32
    return %arg0, %arg2 : i32, i32
  }
  func.func @transform_1(%arg0: i32, %arg1: i32, %arg2: i32) -> (i32, i32) {
    %c0_i32 = arith.constant 0 : i32
    return %arg2, %arg1 : i32, i32
  }
  func.func @transform_2(%arg0: i32, %arg1: i32, %arg2: i32) -> (i32, i32) {
    %c0_i32 = arith.constant 0 : i32
    %c0_i32_0 = arith.constant 0 : i32
    return %c0_i32, %arg1 : i32, i32
  }
  func.func @transform_3(%arg0: i32, %arg1: i32, %arg2: i32) -> (i32, i32) {
    %c0_i32 = arith.constant 0 : i32
    return %arg0, %arg1 : i32, i32
  }
}

</mosaic_0001>

<llo_original>
// kernel: tpu_custom_call.1
$region0: #{tpu_custom_call.1}
  #allocation0 [shape = 'u32[]', space=smem, size = 0x4, offset = 0x4, fixed_abs, tag = 'smem constant byte address 0x4 - core index']
  #allocation1 [shape = 'u32[144,128]{1,0:T(1,128)}', space=vmem, size = 0x12000, scoped, tag = 'internal scratch']
  #allocation2 [shape = 'f32[128,128]{1,0:T(8,128)}', space=vmem, size = 0x10000, scoped, tag = 'scratch operand']
  %s0 = inlined_call_operand.hbm [shape: f32[128,128], index: 0, kind: input, shape index: {}]
  %s1 = inlined_call_operand.hbm [shape: f32[128,128], index: 1, kind: input, shape index: {}]
  %s2 = inlined_call_operand.vmem [shape: f32[1,128], index: 2, kind: input, shape index: {}]
  %s3 = inlined_call_operand.hbm [shape: f32[128,128], index: 3, kind: output, shape index: {}]
  %s4 = sld [smem:[#allocation0]]
  $region38: #{tpu_custom_call.1} parent=0
    _
  %s6 = ssub.s32 1, %s4
  %s7 = scalar_select 0, %s6, %s4
  $region1: #{tpu_custom_call.1} parent=0
    #allocation3 [shape = 'u8[65536]{0}', space=vmem, size = 0x10000, scoped, tag = 'input window, operand 0, single buffered']
    #allocation4 [shape = 's32[1]{0}', space=sflag, size = 0x4, scoped, tag = 'scoped memory for tpu_custom_call.1']
    #allocation5 [shape = 's32[1]{0}', space=sflag, size = 0x4, scoped, tag = 'scoped memory for tpu_custom_call.1']
    #allocation6 [shape = 'u8[65536]{0}', space=vmem, size = 0x10000, scoped, tag = 'input window, operand 1, single buffered']
    #allocation7 [shape = 's32[1]{0}', space=sflag, size = 0x4, scoped, tag = 'scoped memory for tpu_custom_call.1']
    #allocation8 [shape = 'u8[65536]{0}', space=vmem, size = 0x10000, scoped, tag = 'output window, operand 0, single buffered']
    %8 = vsyncpa [#allocation4], 0
    %9 = vsyncpa [#allocation7], 0
    %10 = vsyncpa [#allocation5], 0
    // Predicated region
    $region2: #{tpu_custom_call.1} parent=1 // pred_check
      _
    $region3: #{tpu_custom_call.1} parent=1 // pred_check_branch
      %12 = sbr.rel (0) target = $region5
    $region4: #{tpu_custom_call.1} parent=1 // pred_region
      %s14 = ssub.s32 2048, 2048
      %15 = vsyncadd [#allocation4], %s14
      %s16 = sshll.u32 [#allocation3], 4
      %s17 = int_to_ptr.vmem [resolvable:$true] %s16
      %22 = dma.hbm_to_vmem [thread:$0]  %s0, 2048, %s17, [#allocation4], 128, 128, 8
    $region5: #{tpu_custom_call.1} parent=1 // pred_fallthru
      _
    // Predicated region
    $region6: #{tpu_custom_call.1} parent=1 // pred_check
      _
    $region7: #{tpu_custom_call.1} parent=1 // pred_check_branch
      %24 = sbr.rel (0) target = $region9
    $region8: #{tpu_custom_call.1} parent=1 // pred_region
      %s26 = ssub.s32 2048, 2048
      %27 = vsyncadd [#allocation7], %s26
      %s28 = sshll.u32 [#allocation6], 4
      %s29 = int_to_ptr.vmem [resolvable:$true] %s28
      %34 = dma.hbm_to_vmem [thread:$0]  %s1, 2048, %s29, [#allocation7], 128, 128, 8
    $region9: #{tpu_custom_call.1} parent=1 // pred_fallthru
      _
    // Predicated region
    $region10: #{tpu_custom_call.1} parent=1 // pred_check
      _
    $region11: #{tpu_custom_call.1} parent=1 // pred_check_branch
      %36 = sbr.rel (0) target = $region13
    $region12: #{tpu_custom_call.1} parent=1 // pred_region
      _
    $region13: #{tpu_custom_call.1} parent=1 // pred_fallthru
      _
    // Predicated region
    $region14: #{tpu_custom_call.1} parent=1 // pred_check
      _
    $region15: #{tpu_custom_call.1} parent=1 // pred_check_branch
      %38 = sbr.rel (0) target = $region17
    $region16: #{tpu_custom_call.1} parent=1 // pred_region
      %39 = dma.done [#allocation4], 2048
    $region17: #{tpu_custom_call.1} parent=1 // pred_fallthru
      _
    // Predicated region
    $region18: #{tpu_custom_call.1} parent=1 // pred_check
      _
    $region19: #{tpu_custom_call.1} parent=1 // pred_check_branch
      %41 = sbr.rel (0) target = $region21
    $region20: #{tpu_custom_call.1} parent=1 // pred_region
      %42 = dma.done [#allocation7], 2048
    $region21: #{tpu_custom_call.1} parent=1 // pred_fallthru
      _
    %p43 = scmp.eq.s32.totalorder 0, 0
    // Predicated region
    $region22: #{tpu_custom_call.1} parent=1 // pred_check
      %p44 = pneg %p43
    $region23: #{tpu_custom_call.1} parent=1 // pred_check_branch
      %46 = sbr.rel (%p44) target = $region25
    $region24: #{tpu_custom_call.1} parent=1 // pred_region
      %47 = vst [vmem:[#allocation2] sm:$0xff] 0.0
      %48 = vst [vmem:[#allocation2 + $0x8] sm:$0xff] 0.0
      %49 = vst [vmem:[#allocation2 + $0x10] sm:$0xff] 0.0
      %50 = vst [vmem:[#allocation2 + $0x18] sm:$0xff] 0.0
      %51 = vst [vmem:[#allocation2 + $0x20] sm:$0xff] 0.0
      %52 = vst [vmem:[#allocation2 + $0x28] sm:$0xff] 0.0
      %53 = vst [vmem:[#allocation2 + $0x30] sm:$0xff] 0.0
      %54 = vst [vmem:[#allocation2 + $0x38] sm:$0xff] 0.0
      %55 = vst [vmem:[#allocation2 + $0x40] sm:$0xff] 0.0
      %56 = vst [vmem:[#allocation2 + $0x48] sm:$0xff] 0.0
      %57 = vst [vmem:[#allocation2 + $0x50] sm:$0xff] 0.0
      %58 = vst [vmem:[#allocation2 + $0x58] sm:$0xff] 0.0
      %59 = vst [vmem:[#allocation2 + $0x60] sm:$0xff] 0.0
      %60 = vst [vmem:[#allocation2 + $0x68] sm:$0xff] 0.0
      %61 = vst [vmem:[#allocation2 + $0x70] sm:$0xff] 0.0
      %62 = vst [vmem:[#allocation2 + $0x78] sm:$0xff] 0.0
    $region25: #{tpu_custom_call.1} parent=1 // pred_fallthru
      _
    %v63 = vld [vmem:[#allocation2] sm:$0xff]
    %v64 = vld [vmem:[#allocation2 + $0x8] sm:$0xff]
    %v65 = vld [vmem:[#allocation2 + $0x10] sm:$0xff]
    %v66 = vld [vmem:[#allocation2 + $0x18] sm:$0xff]
    %v67 = vld [vmem:[#allocation2 + $0x20] sm:$0xff]
    %v68 = vld [vmem:[#allocation2 + $0x28] sm:$0xff]
    %v69 = vld [vmem:[#allocation2 + $0x30] sm:$0xff]
    %v70 = vld [vmem:[#allocation2 + $0x38] sm:$0xff]
    %v71 = vld [vmem:[#allocation2 + $0x40] sm:$0xff]
    %v72 = vld [vmem:[#allocation2 + $0x48] sm:$0xff]
    %v73 = vld [vmem:[#allocation2 + $0x50] sm:$0xff]
    %v74 = vld [vmem:[#allocation2 + $0x58] sm:$0xff]
    %v75 = vld [vmem:[#allocation2 + $0x60] sm:$0xff]
    %v76 = vld [vmem:[#allocation2 + $0x68] sm:$0xff]
    %v77 = vld [vmem:[#allocation2 + $0x70] sm:$0xff]
    %v78 = vld [vmem:[#allocation2 + $0x78] sm:$0xff]
    %v79 = vld [vmem:[#allocation3] sm:$0xff]
    %v80 = vld [vmem:[#allocation3 + $0x8] sm:$0xff]
    %v81 = vld [vmem:[#allocation3 + $0x10] sm:$0xff]
    %v82 = vld [vmem:[#allocation3 + $0x18] sm:$0xff]
    %v83 = vld [vmem:[#allocation3 + $0x20] sm:$0xff]
    %v84 = vld [vmem:[#allocation3 + $0x28] sm:$0xff]
    %v85 = vld [vmem:[#allocation3 + $0x30] sm:$0xff]
    %v86 = vld [vmem:[#allocation3 + $0x38] sm:$0xff]
    %v87 = vld [vmem:[#allocation3 + $0x40] sm:$0xff]
    %v88 = vld [vmem:[#allocation3 + $0x48] sm:$0xff]
    %v89 = vld [vmem:[#allocation3 + $0x50] sm:$0xff]
    %v90 = vld [vmem:[#allocation3 + $0x58] sm:$0xff]
    %v91 = vld [vmem:[#allocation3 + $0x60] sm:$0xff]
    %v92 = vld [vmem:[#allocation3 + $0x68] sm:$0xff]
    %v93 = vld [vmem:[#allocation3 + $0x70] sm:$0xff]
    %v94 = vld [vmem:[#allocation3 + $0x78] sm:$0xff]
    %v95 = vld [vmem:[#allocation6] sm:$0xff]
    %v96 = vld [vmem:[#allocation6 + $0x8] sm:$0xff]
    %v97 = vld [vmem:[#allocation6 + $0x10] sm:$0xff]
    %v98 = vld [vmem:[#allocation6 + $0x18] sm:$0xff]
    %v99 = vld [vmem:[#allocation6 + $0x20] sm:$0xff]
    %v100 = vld [vmem:[#allocation6 + $0x28] sm:$0xff]
    %v101 = vld [vmem:[#allocation6 + $0x30] sm:$0xff]
    %v102 = vld [vmem:[#allocation6 + $0x38] sm:$0xff]
    %v103 = vld [vmem:[#allocation6 + $0x40] sm:$0xff]
    %v104 = vld [vmem:[#allocation6 + $0x48] sm:$0xff]
    %v105 = vld [vmem:[#allocation6 + $0x50] sm:$0xff]
    %v106 = vld [vmem:[#allocation6 + $0x58] sm:$0xff]
    %v107 = vld [vmem:[#allocation6 + $0x60] sm:$0xff]
    %v108 = vld [vmem:[#allocation6 + $0x68] sm:$0xff]
    %v109 = vld [vmem:[#allocation6 + $0x70] sm:$0xff]
    %v110 = vld [vmem:[#allocation6 + $0x78] sm:$0xff]
    %111 = vmatprep.subr.mxu0 0.0
    %112 = vmatpush1.msra.mxu0 %v95
    %113 = vmatprep.subr.mxu0 0.0
    %114 = vmatpush1.msra.mxu0 %v96
    %115 = vmatprep.subr.mxu0 0.0
    %116 = vmatpush1.msra.mxu0 %v97
    %117 = vmatprep.subr.mxu0 0.0
    %118 = vmatpush1.msra.mxu0 %v98
    %119 = vmatprep.subr.mxu0 0.0
    %120 = vmatpush1.msra.mxu0 %v99
    %121 = vmatprep.subr.mxu0 0.0
    %122 = vmatpush1.msra.mxu0 %v100
    %123 = vmatprep.subr.mxu0 0.0
    %124 = vmatpush1.msra.mxu0 %v101
    %125 = vmatprep.subr.mxu0 0.0
    %126 = vmatpush1.msra.mxu0 %v102
    %127 = vmatprep.subr.mxu0 0.0
    %128 = vmatpush1.msra.mxu0 %v103
    %129 = vmatprep.subr.mxu0 0.0
    %130 = vmatpush1.msra.mxu0 %v104
    %131 = vmatprep.subr.mxu0 0.0
    %132 = vmatpush1.msra.mxu0 %v105
    %133 = vmatprep.subr.mxu0 0.0
    %134 = vmatpush1.msra.mxu0 %v106
    %135 = vmatprep.subr.mxu0 0.0
    %136 = vmatpush1.msra.mxu0 %v107
    %137 = vmatprep.subr.mxu0 0.0
    %138 = vmatpush1.msra.mxu0 %v108
    %139 = vmatprep.subr.mxu0 0.0
    %140 = vmatpush1.msra.mxu0 %v109
    %141 = vmatprep.subr.mxu0 0.0
    %142 = vmatpush1.msra.mxu0 %v110
    %143 = vmatprep.subr.mxu0 0.0
    %144 = vmatpush1.msra.mxu0 0.0
    %145 = vmatprep.subr.mxu0 0.0
    %146 = vmatpush1.msra.mxu0 0.0
    %147 = vmatprep.subr.mxu0 0.0
    %148 = vmatpush1.msra.mxu0 0.0
    %149 = vmatprep.subr.mxu0 0.0
    %150 = vmatpush1.msra.mxu0 0.0
    %151 = vmatprep.subr.mxu0 0.0
    %152 = vmatpush1.msra.mxu0 0.0
    %153 = vmatprep.subr.mxu0 0.0
    %154 = vmatpush1.msra.mxu0 0.0
    %155 = vmatprep.subr.mxu0 0.0
    %156 = vmatpush1.msra.mxu0 0.0
    %157 = vmatprep.subr.mxu0 0.0
    %158 = vmatpush1.msra.mxu0 0.0
    %159 = vmatprep.subr.mxu0 0.0
    %160 = vmatpush1.msra.mxu0 0.0
    %161 = vmatprep.subr.mxu0 0.0
    %162 = vmatpush1.msra.mxu0 0.0
    %163 = vmatprep.subr.mxu0 0.0
    %164 = vmatpush1.msra.mxu0 0.0
    %165 = vmatprep.subr.mxu0 0.0
    %166 = vmatpush1.msra.mxu0 0.0
    %167 = vmatprep.subr.mxu0 0.0
    %168 = vmatpush1.msra.mxu0 0.0
    %169 = vmatprep.subr.mxu0 0.0
    %170 = vmatpush1.msra.mxu0 0.0
    %171 = vmatprep.subr.mxu0 0.0
    %172 = vmatpush1.msra.mxu0 0.0
    %173 = vmatprep.subr.mxu0 0.0
    %174 = vmatpush1.msra.mxu0 0.0
    %175 = vmatprep.mubr.f32.mxu0 0.0
    %176 = vmatmul.mubr.f32.gmra.mrb[0].mxu0 %v79
    %v177 = vpop.f32.mrb[0].mxu0
    %v178 = vadd.f32 0.0, %v177
    %v179 = vpop.f32.mrb[0].mxu0
    %180 = vmatprep.mubr.f32.mxu0 0.0
    %181 = vmatmul.mubr.f32.gmra.mrb[0].mxu0 %v80
    %v182 = vpop.f32.mrb[0].mxu0
    %v183 = vadd.f32 0.0, %v182
    %v184 = vpop.f32.mrb[0].mxu0
    %185 = vmatprep.mubr.f32.mxu0 0.0
    %186 = vmatmul.mubr.f32.gmra.mrb[0].mxu0 %v81
    %v187 = vpop.f32.mrb[0].mxu0
    %v188 = vadd.f32 0.0, %v187
    %v189 = vpop.f32.mrb[0].mxu0
    %190 = vmatprep.mubr.f32.mxu0 0.0
    %191 = vmatmul.mubr.f32.gmra.mrb[0].mxu0 %v82
    %v192 = vpop.f32.mrb[0].mxu0
    %v193 = vadd.f32 0.0, %v192
    %v194 = vpop.f32.mrb[0].mxu0
    %195 = vmatprep.mubr.f32.mxu0 0.0
    %196 = vmatmul.mubr.f32.gmra.mrb[0].mxu0 %v83
    %v197 = vpop.f32.mrb[0].mxu0
    %v198 = vadd.f32 0.0, %v197
    %v199 = vpop.f32.mrb[0].mxu0
    %200 = vmatprep.mubr.f32.mxu0 0.0
    %201 = vmatmul.mubr.f32.gmra.mrb[0].mxu0 %v84
    %v202 = vpop.f32.mrb[0].mxu0
    %v203 = vadd.f32 0.0, %v202
    %v204 = vpop.f32.mrb[0].mxu0
    %205 = vmatprep.mubr.f32.mxu0 0.0
    %206 = vmatmul.mubr.f32.gmra.mrb[0].mxu0 %v85
    %v207 = vpop.f32.mrb[0].mxu0
    %v208 = vadd.f32 0.0, %v207
    %v209 = vpop.f32.mrb[0].mxu0
    %210 = vmatprep.mubr.f32.mxu0 0.0
    %211 = vmatmul.mubr.f32.gmra.mrb[0].mxu0 %v86
    %v212 = vpop.f32.mrb[0].mxu0
    %v213 = vadd.f32 0.0, %v212
    %v214 = vpop.f32.mrb[0].mxu0
    %215 = vmatprep.mubr.f32.mxu0 0.0
    %216 = vmatmul.mubr.f32.gmra.mrb[0].mxu0 %v87
    %v217 = vpop.f32.mrb[0].mxu0
    %v218 = vadd.f32 0.0, %v217
    %v219 = vpop.f32.mrb[0].mxu0
    %220 = vmatprep.mubr.f32.mxu0 0.0
    %221 = vmatmul.mubr.f32.gmra.mrb[0].mxu0 %v88
    %v222 = vpop.f32.mrb[0].mxu0
    %v223 = vadd.f32 0.0, %v222
    %v224 = vpop.f32.mrb[0].mxu0
    %225 = vmatprep.mubr.f32.mxu0 0.0
    %226 = vmatmul.mubr.f32.gmra.mrb[0].mxu0 %v89
    %v227 = vpop.f32.mrb[0].mxu0
    %v228 = vadd.f32 0.0, %v227
    %v229 = vpop.f32.mrb[0].mxu0
    %230 = vmatprep.mubr.f32.mxu0 0.0
    %231 = vmatmul.mubr.f32.gmra.mrb[0].mxu0 %v90
    %v232 = vpop.f32.mrb[0].mxu0
    %v233 = vadd.f32 0.0, %v232
    %v234 = vpop.f32.mrb[0].mxu0
    %235 = vmatprep.mubr.f32.mxu0 0.0
    %236 = vmatmul.mubr.f32.gmra.mrb[0].mxu0 %v91
    %v237 = vpop.f32.mrb[0].mxu0
    %v238 = vadd.f32 0.0, %v237
    %v239 = vpop.f32.mrb[0].mxu0
    %240 = vmatprep.mubr.f32.mxu0 0.0
    %241 = vmatmul.mubr.f32.gmra.mrb[0].mxu0 %v92
    %v242 = vpop.f32.mrb[0].mxu0
    %v243 = vadd.f32 0.0, %v242
    %v244 = vpop.f32.mrb[0].mxu0
    %245 = vmatprep.mubr.f32.mxu0 0.0
    %246 = vmatmul.mubr.f32.gmra.mrb[0].mxu0 %v93
    %v247 = vpop.f32.mrb[0].mxu0
    %v248 = vadd.f32 0.0, %v247
    %v249 = vpop.f32.mrb[0].mxu0
    %250 = vmatprep.mubr.f32.mxu0 0.0
    %251 = vmatmul.mubr.f32.gmra.mrb[0].mxu0 %v94
    %v252 = vpop.f32.mrb[0].mxu0
    %v253 = vadd.f32 0.0, %v252
    %v254 = vpop.f32.mrb[0].mxu0
    %255 = vdwg.mxu0
    %v256 = vadd.f32 %v63, %v178
    %v257 = vadd.f32 %v64, %v183
    %v258 = vadd.f32 %v65, %v188
    %v259 = vadd.f32 %v66, %v193
    %v260 = vadd.f32 %v67, %v198
    %v261 = vadd.f32 %v68, %v203
    %v262 = vadd.f32 %v69, %v208
    %v263 = vadd.f32 %v70, %v213
    %v264 = vadd.f32 %v71, %v218
    %v265 = vadd.f32 %v72, %v223
    %v266 = vadd.f32 %v73, %v228
    %v267 = vadd.f32 %v74, %v233
    %v268 = vadd.f32 %v75, %v238
    %v269 = vadd.f32 %v76, %v243
    %v270 = vadd.f32 %v77, %v248
    %v271 = vadd.f32 %v78, %v253
    %272 = vst [vmem:[#allocation2] sm:$0xff] %v256
    %273 = vst [vmem:[#allocation2 + $0x8] sm:$0xff] %v257
    %274 = vst [vmem:[#allocation2 + $0x10] sm:$0xff] %v258
    %275 = vst [vmem:[#allocation2 + $0x18] sm:$0xff] %v259
    %276 = vst [vmem:[#allocation2 + $0x20] sm:$0xff] %v260
    %277 = vst [vmem:[#allocation2 + $0x28] sm:$0xff] %v261
    %278 = vst [vmem:[#allocation2 + $0x30] sm:$0xff] %v262
    %279 = vst [vmem:[#allocation2 + $0x38] sm:$0xff] %v263
    %280 = vst [vmem:[#allocation2 + $0x40] sm:$0xff] %v264
    %281 = vst [vmem:[#allocation2 + $0x48] sm:$0xff] %v265
    %282 = vst [vmem:[#allocation2 + $0x50] sm:$0xff] %v266
    %283 = vst [vmem:[#allocation2 + $0x58] sm:$0xff] %v267
    %284 = vst [vmem:[#allocation2 + $0x60] sm:$0xff] %v268
    %285 = vst [vmem:[#allocation2 + $0x68] sm:$0xff] %v269
    %286 = vst [vmem:[#allocation2 + $0x70] sm:$0xff] %v270
    %287 = vst [vmem:[#allocation2 + $0x78] sm:$0xff] %v271
    // Predicated region
    $region26: #{tpu_custom_call.1} parent=1 // pred_check
      %p288 = pneg %p43
    $region27: #{tpu_custom_call.1} parent=1 // pred_check_branch
      %290 = sbr.rel (%p288) target = $region29
    $region28: #{tpu_custom_call.1} parent=1 // pred_region
      %v291 = vld [vmem:[#allocation2] sm:$0xff]
      %v292 = vld [vmem:[#allocation2 + $0x8] sm:$0xff]
      %v293 = vld [vmem:[#allocation2 + $0x10] sm:$0xff]
      %v294 = vld [vmem:[#allocation2 + $0x18] sm:$0xff]
      %v295 = vld [vmem:[#allocation2 + $0x20] sm:$0xff]
      %v296 = vld [vmem:[#allocation2 + $0x28] sm:$0xff]
      %v297 = vld [vmem:[#allocation2 + $0x30] sm:$0xff]
      %v298 = vld [vmem:[#allocation2 + $0x38] sm:$0xff]
      %v299 = vld [vmem:[#allocation2 + $0x40] sm:$0xff]
      %v300 = vld [vmem:[#allocation2 + $0x48] sm:$0xff]
      %v301 = vld [vmem:[#allocation2 + $0x50] sm:$0xff]
      %v302 = vld [vmem:[#allocation2 + $0x58] sm:$0xff]
      %v303 = vld [vmem:[#allocation2 + $0x60] sm:$0xff]
      %v304 = vld [vmem:[#allocation2 + $0x68] sm:$0xff]
      %v305 = vld [vmem:[#allocation2 + $0x70] sm:$0xff]
      %v306 = vld [vmem:[#allocation2 + $0x78] sm:$0xff]
      %v307 = vld [vmem:[%s2] sm:$0x1]
      %v309 = vlaneseq
      %v310 = vshrl.u32 %v309, 7
      %v311 = vsub.s32 0, %v310
      %v312 = vrot.slane %v307, %v311
      %v314 = vadd.f32 %v291, %v312
      %v315 = vadd.f32 %v292, %v312
      %v316 = vadd.f32 %v293, %v312
      %v317 = vadd.f32 %v294, %v312
      %v318 = vadd.f32 %v295, %v312
      %v319 = vadd.f32 %v296, %v312
      %v320 = vadd.f32 %v297, %v312
      %v321 = vadd.f32 %v298, %v312
      %v322 = vadd.f32 %v299, %v312
      %v323 = vadd.f32 %v300, %v312
      %v324 = vadd.f32 %v301, %v312
      %v325 = vadd.f32 %v302, %v312
      %v326 = vadd.f32 %v303, %v312
      %v327 = vadd.f32 %v304, %v312
      %v328 = vadd.f32 %v305, %v312
      %v329 = vadd.f32 %v306, %v312
      %330 = vst [vmem:[#allocation8] sm:$0xff] %v314
      %331 = vst [vmem:[#allocation8 + $0x8] sm:$0xff] %v315
      %332 = vst [vmem:[#allocation8 + $0x10] sm:$0xff] %v316
      %333 = vst [vmem:[#allocation8 + $0x18] sm:$0xff] %v317
      %334 = vst [vmem:[#allocation8 + $0x20] sm:$0xff] %v318
      %335 = vst [vmem:[#allocation8 + $0x28] sm:$0xff] %v319
      %336 = vst [vmem:[#allocation8 + $0x30] sm:$0xff] %v320
      %337 = vst [vmem:[#allocation8 + $0x38] sm:$0xff] %v321
      %338 = vst [vmem:[#allocation8 + $0x40] sm:$0xff] %v322
      %339 = vst [vmem:[#allocation8 + $0x48] sm:$0xff] %v323
      %340 = vst [vmem:[#allocation8 + $0x50] sm:$0xff] %v324
      %341 = vst [vmem:[#allocation8 + $0x58] sm:$0xff] %v325
      %342 = vst [vmem:[#allocation8 + $0x60] sm:$0xff] %v326
      %343 = vst [vmem:[#allocation8 + $0x68] sm:$0xff] %v327
      %344 = vst [vmem:[#allocation8 + $0x70] sm:$0xff] %v328
      %345 = vst [vmem:[#allocation8 + $0x78] sm:$0xff] %v329
    $region29: #{tpu_custom_call.1} parent=1 // pred_fallthru
      _
    // Predicated region
    $region30: #{tpu_custom_call.1} parent=1 // pred_check
      _
    $region31: #{tpu_custom_call.1} parent=1 // pred_check_branch
      %347 = sbr.rel (0) target = $region33
    $region32: #{tpu_custom_call.1} parent=1 // pred_region
      %s349 = ssub.s32 2048, 2048
      %350 = vsyncadd [#allocation5], %s349
      %s351 = sshll.u32 [#allocation8], 4
      %s352 = int_to_ptr.vmem [resolvable:$true] %s351
      %357 = dma.vmem_to_hbm [thread:$0]  %s352, 2048, %s3, [#allocation5], 128, 128, 8
    $region33: #{tpu_custom_call.1} parent=1 // pred_fallthru
      _
    // Predicated region
    $region34: #{tpu_custom_call.1} parent=1 // pred_check
      _
    $region35: #{tpu_custom_call.1} parent=1 // pred_check_branch
      %359 = sbr.rel (0) target = $region37
    $region36: #{tpu_custom_call.1} parent=1 // pred_region
      %360 = dma.done [#allocation5], 2048
    $region37: #{tpu_custom_call.1} parent=1 // pred_fallthru
      _
    %361 = vsyncpa [#allocation4], 1
    %362 = vsyncpa [#allocation7], 1
    %363 = vsyncpa [#allocation5], 1

</llo_original>
